<compile_context>
chip_gen: v7x
topology: tpu7x:2x2x1
jax: 0.10.0
libtpu: 0.0.40
codegen_flags: <defaults>
</compile_context>

<pallas_src>
import functools

import jax
import jax.numpy as jnp
import numpy as np
from jax.experimental import pallas as pl
from jax.experimental.pallas import tpu as pltpu

BN_EPS = 1e-5


def _round_up(x, m):
    return (x + m - 1) // m * m


def fused_gin_kernel(eps1_ref, h0_ref, ea_ref, src_oh_ref, dst_oh_ref,
                     we_ref, be_ref, w1_ref, b1_ref, w2_ref, b2_ref,
                     out_ref, *, num_layers):
    """Whole GNN_node forward in one invocation; layer loop statically unrolled."""
    f32 = jnp.float32
    bf16 = jnp.bfloat16

    src_oh = src_oh_ref[...]              # [Ep, Np] bf16 one-hot (exact 0/1)
    dst_oh = dst_oh_ref[...]              # [Np, Ep] bf16 one-hot (exact 0/1)
    ea = ea_ref[...]                      # [Ep, Kp] bf16 edge features
    h = h0_ref[...]                       # [Np, Dp] f32 carried node state

    for layer in range(num_layers):       # static unroll (tiny-L regime)
        # edge encoder in-kernel: edge_attr @ we[l] + be[l]
        ee = jnp.dot(ea, we_ref[layer], preferred_element_type=f32) + be_ref[layer]

        # gather x_j = h[src] via one-hot matmul (bf16 operands, f32 accum)
        x_j = jnp.dot(src_oh, h.astype(bf16), preferred_element_type=f32)
        msg = jnp.maximum(x_j + ee, 0.0)                              # f32 VPU

        # aggregate: scatter-add over destination nodes (one-hot matmul)
        agg = jnp.dot(dst_oh, msg.astype(bf16), preferred_element_type=f32)

        # GIN combine; (1 + eps) is a scalar read from SMEM
        pre = eps1_ref[layer] * h + agg                               # [Np, Dp]

        # MLP (eval-mode BatchNorms already folded into w1/b1 and w2/b2)
        z = jnp.dot(pre.astype(bf16), w1_ref[layer],
                    preferred_element_type=f32) + b1_ref[layer]       # [Np, Hp]
        z = jnp.maximum(z, 0.0)
        z = jnp.dot(z.astype(bf16), w2_ref[layer],
                    preferred_element_type=f32) + b2_ref[layer]       # [Np, Dp]

        # inter-layer ReLU: static condition, no per-element select
        if layer != num_layers - 1:
            z = jnp.maximum(z, 0.0)
        h = z

    out_ref[...] = h                      # single lane-dense store at the end


def gnn_node_forward(params, x_idx, edge_index, edge_attr):
    """Pallas implementation of GNN_node.forward (eval mode), fully fused."""
    layers = params["layers"]
    L = len(layers)
    N = x_idx.shape[0]
    D = params["node_emb"].shape[1]
    H = 2 * D
    E, K = edge_attr.shape
    f32, bf16 = jnp.float32, jnp.bfloat16

    # padded sizes: 128 lanes for feature dims, 16 sublanes (bf16 packing) else
    Dp = _round_up(D, 128)
    Hp = _round_up(H, 128)
    Np = _round_up(N, 16)
    Ep = _round_up(E, 16)
    Kp = _round_up(K, 16)

    # node_encoder: Embedding(1, D) lookup (all indices are 0), zero-padded
    h0 = jnp.take(params["node_emb"], x_idx, axis=0).astype(f32)        # [N, D]
    h0_p = jnp.zeros((Np, Dp), f32).at[:N, :D].set(h0)

    # one-hot incidence matrices built directly padded, in bf16 (0/1 exact);
    # padded edge slots use index -1 so they never match (no spurious scatter)
    src_p = jnp.full((Ep,), -1, jnp.int32).at[:E].set(edge_index[0])
    dst_p = jnp.full((Ep,), -1, jnp.int32).at[:E].set(edge_index[1])
    src_oh = (jax.lax.broadcasted_iota(jnp.int32, (Ep, Np), 1)
              == src_p[:, None]).astype(bf16)                           # [Ep, Np]
    dst_oh = (jax.lax.broadcasted_iota(jnp.int32, (Np, Ep), 0)
              == dst_p[None, :]).astype(bf16)                           # [Np, Ep]

    ea_p = jnp.zeros((Ep, Kp), f32).at[:E, :K].set(
        edge_attr.astype(f32)).astype(bf16)                             # [Ep, Kp]

    # ---- fold eval-mode BatchNorms into the Linears; stack / pad / cast ----
    w1f, b1f, w2f, b2f, wef, bef, eps1 = [], [], [], [], [], [], []
    for p in layers:
        s1 = p["g1"] * jax.lax.rsqrt(p["rv1"] + BN_EPS)                 # [1, H]
        w1f.append(p["w1"] * s1)                                         # [D, H]
        b1f.append((p["b1"] - p["rm1"]) * s1 + p["bb1"])                 # [1, H]
        s2 = p["g2"] * jax.lax.rsqrt(p["rv2"] + BN_EPS)                  # [1, D]
        w2f.append(p["w2"] * s2)                                         # [H, D]
        b2f.append((p["b2"] - p["rm2"]) * s2 + p["bb2"])                 # [1, D]
        wef.append(p["we"])                                              # [K, D]
        bef.append(p["be"])                                              # [1, D]
        eps1.append(1.0 + p["eps"][0, 0])

    # matmul operands in bf16 (halves weight DMA, single-pass MXU); biases f32
    w1_p = jnp.zeros((L, Dp, Hp), f32).at[:, :D, :H].set(jnp.stack(w1f)).astype(bf16)
    w2_p = jnp.zeros((L, Hp, Dp), f32).at[:, :H, :D].set(jnp.stack(w2f)).astype(bf16)
    we_p = jnp.zeros((L, Kp, Dp), f32).at[:, :K, :D].set(jnp.stack(wef)).astype(bf16)
    b1_p = jnp.zeros((L, 1, Hp), f32).at[:, :, :H].set(jnp.stack(b1f))
    b2_p = jnp.zeros((L, 1, Dp), f32).at[:, :, :D].set(jnp.stack(b2f))
    be_p = jnp.zeros((L, 1, Dp), f32).at[:, :, :D].set(jnp.stack(bef))
    eps1 = jnp.stack(eps1).astype(f32)                                   # [L] (1+eps)

    kernel = functools.partial(fused_gin_kernel, num_layers=L)
    out_p = pl.pallas_call(
        kernel,
        out_shape=jax.ShapeDtypeStruct((Np, Dp), f32),    # lane-dense (Dp % 128 == 0)
        in_specs=(
            [pl.BlockSpec(memory_space=pltpu.MemorySpace.SMEM)]          # (1+eps)[L]
            + [pl.BlockSpec(memory_space=pltpu.MemorySpace.VMEM)] * 10   # all tensors
        ),
        out_specs=pl.BlockSpec(memory_space=pltpu.MemorySpace.VMEM),
        compiler_params=pltpu.CompilerParams(
            vmem_limit_bytes=32 * 1024 * 1024),
    )(eps1, h0_p, ea_p, src_oh, dst_oh, we_p, be_p, w1_p, b1_p, w2_p, b2_p)

    return out_p[:N, :D]


def init_params(key, num_layer, emb_dim):
    D, H = emb_dim, 2 * emb_dim
    keys = jax.random.split(key, 1 + num_layer)
    params = {"node_emb": jax.random.normal(keys[0], (1, D), jnp.float32)}
    layers = []
    for l in range(num_layer):
        ks = jax.random.split(keys[1 + l], 12)
        layers.append(dict(
            # edge_encoder Linear(7, D) stored transposed: [7, D]
            we=jax.random.normal(ks[0], (7, D), jnp.float32) / np.sqrt(7.0),
            be=0.1 * jax.random.normal(ks[1], (1, D), jnp.float32),
            # mlp Linear(D, 2D) transposed: [D, 2D]
            w1=jax.random.normal(ks[2], (D, H), jnp.float32) / np.sqrt(D),
            b1=0.1 * jax.random.normal(ks[3], (1, H), jnp.float32),
            # mlp BatchNorm1d(2D)
            g1=1.0 + 0.1 * jax.random.normal(ks[4], (1, H), jnp.float32),
            bb1=0.1 * jax.random.normal(ks[5], (1, H), jnp.float32),
            rm1=0.1 * jax.random.normal(ks[6], (1, H), jnp.float32),
            rv1=1.0 + 0.1 * jnp.abs(jax.random.normal(ks[7], (1, H), jnp.float32)),
            # mlp Linear(2D, D) transposed: [2D, D]
            w2=jax.random.normal(ks[8], (H, D), jnp.float32) / np.sqrt(H),
            b2=0.1 * jax.random.normal(ks[9], (1, D), jnp.float32),
            # outer BatchNorm1d(D)
            g2=1.0 + 0.1 * jax.random.normal(ks[10], (1, D), jnp.float32),
            bb2=0.1 * jax.random.normal(ks[11], (1, D), jnp.float32),
            rm2=jnp.zeros((1, D), jnp.float32),
            rv2=jnp.ones((1, D), jnp.float32),
            # GIN eps parameter, initialized to 0 (torch.Tensor([0]))
            eps=jnp.zeros((1, 1), jnp.float32),
        ))
    params["layers"] = layers
    return params


def gnn_node_reference(params, x_idx, edge_index, edge_attr):
    """Pure-JAX f32 reference of the same eval-mode semantics."""
    h = jnp.take(params["node_emb"], x_idx, axis=0).astype(jnp.float32)
    num_layer = len(params["layers"])
    for layer in range(num_layer):
        p = params["layers"][layer]
        e = edge_attr @ p["we"] + p["be"]
        msg = jax.nn.relu(h[edge_index[0]] + e)
        agg = jnp.zeros_like(h).at[edge_index[1]].add(msg)
        pre = (1.0 + p["eps"][0, 0]) * h + agg
        z = pre @ p["w1"] + p["b1"]
        z = (z - p["rm1"]) / jnp.sqrt(p["rv1"] + BN_EPS) * p["g1"] + p["bb1"]
        z = jax.nn.relu(z)
        z = z @ p["w2"] + p["b2"]
        z = (z - p["rm2"]) / jnp.sqrt(p["rv2"] + BN_EPS) * p["g2"] + p["bb2"]
        if layer != num_layer - 1:
            z = jax.nn.relu(z)
        h = z
    return h


if __name__ == "__main__":
    num_layer = 2
    emb_dim = 32
    N = 16     # nodes
    E = 24     # edges

    key = jax.random.PRNGKey(0)
    k_params, k_ei, k_ea = jax.random.split(key, 3)

    params = init_params(k_params, num_layer, emb_dim)
    # batched_data.x: node indices into Embedding(1, emb_dim) -> all zeros
    x_idx = jnp.zeros((N,), dtype=jnp.int32)
    edge_index = jax.random.randint(k_ei, (2, E), 0, N, dtype=jnp.int32)
    edge_attr = jax.random.normal(k_ea, (E, 7), jnp.float32)

    forward = jax.jit(gnn_node_forward)
    out = jax.block_until_ready(forward(params, x_idx, edge_index, edge_attr))

    ref = jax.block_until_ready(
        gnn_node_reference(params, x_idx, edge_index, edge_attr))
    # bf16 matmul operands (f32 accumulation) -> widened tolerance vs f32 ref,
    # as flagged in the performance review's correctness notes.
    np.testing.assert_allclose(np.asarray(out), np.asarray(ref),
                               rtol=5e-2, atol=1e-1)

    assert out.shape == (N, emb_dim) and out.dtype == jnp.float32
    print("KERNEL_OK")
</pallas_src>

<mosaic_0001>
module attributes {stable_mosaic.version = 11 : i64} {
  func.func @fused_gin_kernel(%arg0: memref<2xf32, #tpu.memory_space<smem>>, %arg1: memref<16x128xf32, #tpu.memory_space<vmem>>, %arg2: memref<32x16xbf16, #tpu.memory_space<vmem>>, %arg3: memref<32x16xbf16, #tpu.memory_space<vmem>>, %arg4: memref<16x32xbf16, #tpu.memory_space<vmem>>, %arg5: memref<2x16x128xbf16, #tpu.memory_space<vmem>>, %arg6: memref<2x1x128xf32, #tpu.memory_space<vmem>>, %arg7: memref<2x128x128xbf16, #tpu.memory_space<vmem>>, %arg8: memref<2x1x128xf32, #tpu.memory_space<vmem>>, %arg9: memref<2x128x128xbf16, #tpu.memory_space<vmem>>, %arg10: memref<2x1x128xf32, #tpu.memory_space<vmem>>, %arg11: memref<16x128xf32, #tpu.memory_space<vmem>>) attributes {dimension_semantics = [], scalar_prefetch = 0 : i64, scratch_operands = 0 : i64, tpu.core_type = #tpu.core_type<tc>} {
    %c0 = arith.constant 0 : index
    %c0_0 = arith.constant 0 : index
    %0 = vector.load %arg3[%c0, %c0_0] : memref<32x16xbf16, #tpu.memory_space<vmem>>, vector<32x16xbf16>
    %c0_1 = arith.constant 0 : index
    %c0_2 = arith.constant 0 : index
    %1 = vector.load %arg4[%c0_1, %c0_2] : memref<16x32xbf16, #tpu.memory_space<vmem>>, vector<16x32xbf16>
    %c0_3 = arith.constant 0 : index
    %c0_4 = arith.constant 0 : index
    %2 = vector.load %arg2[%c0_3, %c0_4] : memref<32x16xbf16, #tpu.memory_space<vmem>>, vector<32x16xbf16>
    %c0_5 = arith.constant 0 : index
    %c0_6 = arith.constant 0 : index
    %3 = vector.load %arg1[%c0_5, %c0_6] : memref<16x128xf32, #tpu.memory_space<vmem>>, vector<16x128xf32>
    %c0_7 = arith.constant 0 : index
    %c0_8 = arith.constant 0 : index
    %c0_9 = arith.constant 0 : index
    %4 = vector.load %arg5[%c0_7, %c0_8, %c0_9] : memref<2x16x128xbf16, #tpu.memory_space<vmem>>, vector<1x16x128xbf16>
    %5 = vector.shape_cast %4 : vector<1x16x128xbf16> to vector<16x128xbf16>
    %cst = arith.constant dense<0.000000e+00> : vector<32x128xf32>
    %6 = tpu.matmul %2, %5, %cst {dimension_numbers = #tpu.dot_dimension_numbers<[1], [0], [0], [1], [0, 0, 1, 1], [], []>} : vector<32x16xbf16>, vector<16x128xbf16>, vector<32x128xf32> -> vector<32x128xf32>
    %c0_10 = arith.constant 0 : index
    %c0_11 = arith.constant 0 : index
    %c0_12 = arith.constant 0 : index
    %7 = vector.load %arg6[%c0_10, %c0_11, %c0_12] : memref<2x1x128xf32, #tpu.memory_space<vmem>>, vector<1x1x128xf32>
    %8 = vector.shape_cast %7 : vector<1x1x128xf32> to vector<1x128xf32>
    %9 = vector.broadcast %8 : vector<1x128xf32> to vector<32x128xf32>
    %10 = arith.addf %6, %9 : vector<32x128xf32>
    %11 = arith.truncf %3 : vector<16x128xf32> to vector<16x128xbf16>
    %cst_13 = arith.constant dense<0.000000e+00> : vector<32x128xf32>
    %12 = tpu.matmul %0, %11, %cst_13 {dimension_numbers = #tpu.dot_dimension_numbers<[1], [0], [0], [1], [0, 0, 1, 1], [], []>} : vector<32x16xbf16>, vector<16x128xbf16>, vector<32x128xf32> -> vector<32x128xf32>
    %13 = arith.addf %12, %10 : vector<32x128xf32>
    %cst_14 = arith.constant 0.000000e+00 : f32
    %14 = vector.broadcast %cst_14 : f32 to vector<32x128xf32>
    %15 = arith.maximumf %13, %14 : vector<32x128xf32>
    %16 = arith.truncf %15 : vector<32x128xf32> to vector<32x128xbf16>
    %cst_15 = arith.constant dense<0.000000e+00> : vector<16x128xf32>
    %17 = tpu.matmul %1, %16, %cst_15 {dimension_numbers = #tpu.dot_dimension_numbers<[1], [0], [0], [1], [0, 0, 1, 1], [], []>} : vector<16x32xbf16>, vector<32x128xbf16>, vector<16x128xf32> -> vector<16x128xf32>
    %c0_16 = arith.constant 0 : index
    %18 = memref.load %arg0[%c0_16] : memref<2xf32, #tpu.memory_space<smem>>
    %19 = vector.broadcast %18 : f32 to vector<16x128xf32>
    %20 = arith.mulf %19, %3 : vector<16x128xf32>
    %21 = arith.addf %20, %17 : vector<16x128xf32>
    %22 = arith.truncf %21 : vector<16x128xf32> to vector<16x128xbf16>
    %c0_17 = arith.constant 0 : index
    %c0_18 = arith.constant 0 : index
    %c0_19 = arith.constant 0 : index
    %23 = vector.load %arg7[%c0_17, %c0_18, %c0_19] : memref<2x128x128xbf16, #tpu.memory_space<vmem>>, vector<1x128x128xbf16>
    %24 = vector.shape_cast %23 : vector<1x128x128xbf16> to vector<128x128xbf16>
    %cst_20 = arith.constant dense<0.000000e+00> : vector<16x128xf32>
    %25 = tpu.matmul %22, %24, %cst_20 {dimension_numbers = #tpu.dot_dimension_numbers<[1], [0], [0], [1], [0, 0, 1, 1], [], []>} : vector<16x128xbf16>, vector<128x128xbf16>, vector<16x128xf32> -> vector<16x128xf32>
    %c0_21 = arith.constant 0 : index
    %c0_22 = arith.constant 0 : index
    %c0_23 = arith.constant 0 : index
    %26 = vector.load %arg8[%c0_21, %c0_22, %c0_23] : memref<2x1x128xf32, #tpu.memory_space<vmem>>, vector<1x1x128xf32>
    %27 = vector.shape_cast %26 : vector<1x1x128xf32> to vector<1x128xf32>
    %28 = vector.broadcast %27 : vector<1x128xf32> to vector<16x128xf32>
    %29 = arith.addf %25, %28 : vector<16x128xf32>
    %cst_24 = arith.constant 0.000000e+00 : f32
    %30 = vector.broadcast %cst_24 : f32 to vector<16x128xf32>
    %31 = arith.maximumf %29, %30 : vector<16x128xf32>
    %32 = arith.truncf %31 : vector<16x128xf32> to vector<16x128xbf16>
    %c0_25 = arith.constant 0 : index
    %c0_26 = arith.constant 0 : index
    %c0_27 = arith.constant 0 : index
    %33 = vector.load %arg9[%c0_25, %c0_26, %c0_27] : memref<2x128x128xbf16, #tpu.memory_space<vmem>>, vector<1x128x128xbf16>
    %34 = vector.shape_cast %33 : vector<1x128x128xbf16> to vector<128x128xbf16>
    %cst_28 = arith.constant dense<0.000000e+00> : vector<16x128xf32>
    %35 = tpu.matmul %32, %34, %cst_28 {dimension_numbers = #tpu.dot_dimension_numbers<[1], [0], [0], [1], [0, 0, 1, 1], [], []>} : vector<16x128xbf16>, vector<128x128xbf16>, vector<16x128xf32> -> vector<16x128xf32>
    %c0_29 = arith.constant 0 : index
    %c0_30 = arith.constant 0 : index
    %c0_31 = arith.constant 0 : index
    %36 = vector.load %arg10[%c0_29, %c0_30, %c0_31] : memref<2x1x128xf32, #tpu.memory_space<vmem>>, vector<1x1x128xf32>
    %37 = vector.shape_cast %36 : vector<1x1x128xf32> to vector<1x128xf32>
    %38 = vector.broadcast %37 : vector<1x128xf32> to vector<16x128xf32>
    %39 = arith.addf %35, %38 : vector<16x128xf32>
    %cst_32 = arith.constant 0.000000e+00 : f32
    %40 = vector.broadcast %cst_32 : f32 to vector<16x128xf32>
    %41 = arith.maximumf %39, %40 : vector<16x128xf32>
    %c1 = arith.constant 1 : index
    %c0_33 = arith.constant 0 : index
    %c0_34 = arith.constant 0 : index
    %42 = vector.load %arg5[%c1, %c0_33, %c0_34] : memref<2x16x128xbf16, #tpu.memory_space<vmem>>, vector<1x16x128xbf16>
    %43 = vector.shape_cast %42 : vector<1x16x128xbf16> to vector<16x128xbf16>
    %cst_35 = arith.constant dense<0.000000e+00> : vector<32x128xf32>
    %44 = tpu.matmul %2, %43, %cst_35 {dimension_numbers = #tpu.dot_dimension_numbers<[1], [0], [0], [1], [0, 0, 1, 1], [], []>} : vector<32x16xbf16>, vector<16x128xbf16>, vector<32x128xf32> -> vector<32x128xf32>
    %c1_36 = arith.constant 1 : index
    %c0_37 = arith.constant 0 : index
    %c0_38 = arith.constant 0 : index
    %45 = vector.load %arg6[%c1_36, %c0_37, %c0_38] : memref<2x1x128xf32, #tpu.memory_space<vmem>>, vector<1x1x128xf32>
    %46 = vector.shape_cast %45 : vector<1x1x128xf32> to vector<1x128xf32>
    %47 = vector.broadcast %46 : vector<1x128xf32> to vector<32x128xf32>
    %48 = arith.addf %44, %47 : vector<32x128xf32>
    %49 = arith.truncf %41 : vector<16x128xf32> to vector<16x128xbf16>
    %cst_39 = arith.constant dense<0.000000e+00> : vector<32x128xf32>
    %50 = tpu.matmul %0, %49, %cst_39 {dimension_numbers = #tpu.dot_dimension_numbers<[1], [0], [0], [1], [0, 0, 1, 1], [], []>} : vector<32x16xbf16>, vector<16x128xbf16>, vector<32x128xf32> -> vector<32x128xf32>
    %51 = arith.addf %50, %48 : vector<32x128xf32>
    %cst_40 = arith.constant 0.000000e+00 : f32
    %52 = vector.broadcast %cst_40 : f32 to vector<32x128xf32>
    %53 = arith.maximumf %51, %52 : vector<32x128xf32>
    %54 = arith.truncf %53 : vector<32x128xf32> to vector<32x128xbf16>
    %cst_41 = arith.constant dense<0.000000e+00> : vector<16x128xf32>
    %55 = tpu.matmul %1, %54, %cst_41 {dimension_numbers = #tpu.dot_dimension_numbers<[1], [0], [0], [1], [0, 0, 1, 1], [], []>} : vector<16x32xbf16>, vector<32x128xbf16>, vector<16x128xf32> -> vector<16x128xf32>
    %c1_42 = arith.constant 1 : index
    %56 = memref.load %arg0[%c1_42] : memref<2xf32, #tpu.memory_space<smem>>
    %57 = vector.broadcast %56 : f32 to vector<16x128xf32>
    %58 = arith.mulf %57, %41 : vector<16x128xf32>
    %59 = arith.addf %58, %55 : vector<16x128xf32>
    %60 = arith.truncf %59 : vector<16x128xf32> to vector<16x128xbf16>
    %c1_43 = arith.constant 1 : index
    %c0_44 = arith.constant 0 : index
    %c0_45 = arith.constant 0 : index
    %61 = vector.load %arg7[%c1_43, %c0_44, %c0_45] : memref<2x128x128xbf16, #tpu.memory_space<vmem>>, vector<1x128x128xbf16>
    %62 = vector.shape_cast %61 : vector<1x128x128xbf16> to vector<128x128xbf16>
    %cst_46 = arith.constant dense<0.000000e+00> : vector<16x128xf32>
    %63 = tpu.matmul %60, %62, %cst_46 {dimension_numbers = #tpu.dot_dimension_numbers<[1], [0], [0], [1], [0, 0, 1, 1], [], []>} : vector<16x128xbf16>, vector<128x128xbf16>, vector<16x128xf32> -> vector<16x128xf32>
    %c1_47 = arith.constant 1 : index
    %c0_48 = arith.constant 0 : index
    %c0_49 = arith.constant 0 : index
    %64 = vector.load %arg8[%c1_47, %c0_48, %c0_49] : memref<2x1x128xf32, #tpu.memory_space<vmem>>, vector<1x1x128xf32>
    %65 = vector.shape_cast %64 : vector<1x1x128xf32> to vector<1x128xf32>
    %66 = vector.broadcast %65 : vector<1x128xf32> to vector<16x128xf32>
    %67 = arith.addf %63, %66 : vector<16x128xf32>
    %cst_50 = arith.constant 0.000000e+00 : f32
    %68 = vector.broadcast %cst_50 : f32 to vector<16x128xf32>
    %69 = arith.maximumf %67, %68 : vector<16x128xf32>
    %70 = arith.truncf %69 : vector<16x128xf32> to vector<16x128xbf16>
    %c1_51 = arith.constant 1 : index
    %c0_52 = arith.constant 0 : index
    %c0_53 = arith.constant 0 : index
    %71 = vector.load %arg9[%c1_51, %c0_52, %c0_53] : memref<2x128x128xbf16, #tpu.memory_space<vmem>>, vector<1x128x128xbf16>
    %72 = vector.shape_cast %71 : vector<1x128x128xbf16> to vector<128x128xbf16>
    %cst_54 = arith.constant dense<0.000000e+00> : vector<16x128xf32>
    %73 = tpu.matmul %70, %72, %cst_54 {dimension_numbers = #tpu.dot_dimension_numbers<[1], [0], [0], [1], [0, 0, 1, 1], [], []>} : vector<16x128xbf16>, vector<128x128xbf16>, vector<16x128xf32> -> vector<16x128xf32>
    %c1_55 = arith.constant 1 : index
    %c0_56 = arith.constant 0 : index
    %c0_57 = arith.constant 0 : index
    %74 = vector.load %arg10[%c1_55, %c0_56, %c0_57] : memref<2x1x128xf32, #tpu.memory_space<vmem>>, vector<1x1x128xf32>
    %75 = vector.shape_cast %74 : vector<1x1x128xf32> to vector<1x128xf32>
    %76 = vector.broadcast %75 : vector<1x128xf32> to vector<16x128xf32>
    %77 = arith.addf %73, %76 : vector<16x128xf32>
    %c0_58 = arith.constant 0 : index
    %c0_59 = arith.constant 0 : index
    %78 = vector.load %arg11[%c0_58, %c0_59] : memref<16x128xf32, #tpu.memory_space<vmem>>, vector<16x128xf32>
    tpu.vector_store %arg11[%c0_58, %c0_59], %77 {strides = array<i32>} : memref<16x128xf32, #tpu.memory_space<vmem>>, vector<16x128xf32>,
    return
  }
}

</mosaic_0001>

<llo_original>
// kernel: gnn_node_forward.1
$region0: #{gnn_node_forward.1}
  #allocation0 [shape = 'u32[]', space=smem, size = 0x4, offset = 0x4, fixed_abs, tag = 'smem constant byte address 0x4 - core index']
  #allocation1 [shape = 'u32[144,128]{1,0:T(1,128)}', space=vmem, size = 0x12000, scoped, tag = 'internal scratch']
  %s0 = inlined_call_operand.vmem [shape: f32[2], index: 0, kind: input, shape index: {}]
  %s1 = inlined_call_operand.vmem [shape: f32[16,128], index: 1, kind: input, shape index: {}]
  %s2 = inlined_call_operand.vmem [shape: bf16[32,16], index: 2, kind: input, shape index: {}]
  %s3 = inlined_call_operand.vmem [shape: bf16[32,16], index: 3, kind: input, shape index: {}]
  %s4 = inlined_call_operand.vmem [shape: bf16[16,32], index: 4, kind: input, shape index: {}]
  %s5 = inlined_call_operand.vmem [shape: bf16[2,16,128], index: 5, kind: input, shape index: {}]
  %s6 = inlined_call_operand.vmem [shape: f32[2,1,128], index: 6, kind: input, shape index: {}]
  %s7 = inlined_call_operand.vmem [shape: bf16[2,128,128], index: 7, kind: input, shape index: {}]
  %s8 = inlined_call_operand.vmem [shape: f32[2,1,128], index: 8, kind: input, shape index: {}]
  %s9 = inlined_call_operand.vmem [shape: bf16[2,128,128], index: 9, kind: input, shape index: {}]
  %s10 = inlined_call_operand.vmem [shape: f32[2,1,128], index: 10, kind: input, shape index: {}]
  %s11 = inlined_call_operand.hbm [shape: f32[16,128], index: 11, kind: output, shape index: {}]
  %s12 = sld [smem:[#allocation0]]
  $region58: #{gnn_node_forward.1} parent=0
    _
  %s14 = ssub.s32 1, %s12
  %s15 = scalar_select 0, %s14, %s12
  $region1: #{gnn_node_forward.1} parent=0
    #allocation2 [shape = 'u8[512]{0}', space=smem, size = 0x200, scoped, tag = 'input window, operand 0, single buffered']
    #allocation3 [shape = 's32[1]{0}', space=sflag, size = 0x4, scoped, tag = 'scoped memory for gnn_node_forward.1']
    #allocation4 [shape = 's32[1]{0}', space=sflag, size = 0x4, scoped, tag = 'scoped memory for gnn_node_forward.1']
    #allocation5 [shape = 'u8[8192]{0}', space=vmem, size = 0x2000, scoped, tag = 'output window, operand 0, single buffered']
    %16 = vsyncpa [#allocation4], 0
    %17 = vsyncpa [#allocation3], 0
    // Predicated region
    $region2: #{gnn_node_forward.1} parent=1 // pred_check
      _
    $region3: #{gnn_node_forward.1} parent=1 // pred_check_branch
      %19 = sbr.rel (0) target = $region5
    $region4: #{gnn_node_forward.1} parent=1 // pred_region
      %s21 = ssub.s32 16, 16
      %22 = vsyncadd [#allocation4], %s21
      %s24 = sshll.u32 %s0, 4
      %s25 = int_to_ptr.vmem [resolvable:$true] %s24
      %27 = dma.vmem_to_smem %s25, 16, [#allocation2], [#allocation4]
    $region5: #{gnn_node_forward.1} parent=1 // pred_fallthru
      _
    // Predicated region
    $region6: #{gnn_node_forward.1} parent=1 // pred_check
      _
    $region7: #{gnn_node_forward.1} parent=1 // pred_check_branch
      %29 = sbr.rel (0) target = $region9
    $region8: #{gnn_node_forward.1} parent=1 // pred_region
      _
    $region9: #{gnn_node_forward.1} parent=1 // pred_fallthru
      _
    // Predicated region
    $region10: #{gnn_node_forward.1} parent=1 // pred_check
      _
    $region11: #{gnn_node_forward.1} parent=1 // pred_check_branch
      %31 = sbr.rel (0) target = $region13
    $region12: #{gnn_node_forward.1} parent=1 // pred_region
      _
    $region13: #{gnn_node_forward.1} parent=1 // pred_fallthru
      _
    // Predicated region
    $region14: #{gnn_node_forward.1} parent=1 // pred_check
      _
    $region15: #{gnn_node_forward.1} parent=1 // pred_check_branch
      %33 = sbr.rel (0) target = $region17
    $region16: #{gnn_node_forward.1} parent=1 // pred_region
      _
    $region17: #{gnn_node_forward.1} parent=1 // pred_fallthru
      _
    // Predicated region
    $region18: #{gnn_node_forward.1} parent=1 // pred_check
      _
    $region19: #{gnn_node_forward.1} parent=1 // pred_check_branch
      %35 = sbr.rel (0) target = $region21
    $region20: #{gnn_node_forward.1} parent=1 // pred_region
      _
    $region21: #{gnn_node_forward.1} parent=1 // pred_fallthru
      _
    // Predicated region
    $region22: #{gnn_node_forward.1} parent=1 // pred_check
      _
    $region23: #{gnn_node_forward.1} parent=1 // pred_check_branch
      %37 = sbr.rel (0) target = $region25
    $region24: #{gnn_node_forward.1} parent=1 // pred_region
      _
    $region25: #{gnn_node_forward.1} parent=1 // pred_fallthru
      _
    // Predicated region
    $region26: #{gnn_node_forward.1} parent=1 // pred_check
      _
    $region27: #{gnn_node_forward.1} parent=1 // pred_check_branch
      %39 = sbr.rel (0) target = $region29
    $region28: #{gnn_node_forward.1} parent=1 // pred_region
      _
    $region29: #{gnn_node_forward.1} parent=1 // pred_fallthru
      _
    // Predicated region
    $region30: #{gnn_node_forward.1} parent=1 // pred_check
      _
    $region31: #{gnn_node_forward.1} parent=1 // pred_check_branch
      %41 = sbr.rel (0) target = $region33
    $region32: #{gnn_node_forward.1} parent=1 // pred_region
      _
    $region33: #{gnn_node_forward.1} parent=1 // pred_fallthru
      _
    // Predicated region
    $region34: #{gnn_node_forward.1} parent=1 // pred_check
      _
    $region35: #{gnn_node_forward.1} parent=1 // pred_check_branch
      %43 = sbr.rel (0) target = $region37
    $region36: #{gnn_node_forward.1} parent=1 // pred_region
      _
    $region37: #{gnn_node_forward.1} parent=1 // pred_fallthru
      _
    // Predicated region
    $region38: #{gnn_node_forward.1} parent=1 // pred_check
      _
    $region39: #{gnn_node_forward.1} parent=1 // pred_check_branch
      %45 = sbr.rel (0) target = $region41
    $region40: #{gnn_node_forward.1} parent=1 // pred_region
      _
    $region41: #{gnn_node_forward.1} parent=1 // pred_fallthru
      _
    // Predicated region
    $region42: #{gnn_node_forward.1} parent=1 // pred_check
      _
    $region43: #{gnn_node_forward.1} parent=1 // pred_check_branch
      %47 = sbr.rel (0) target = $region45
    $region44: #{gnn_node_forward.1} parent=1 // pred_region
      _
    $region45: #{gnn_node_forward.1} parent=1 // pred_fallthru
      _
    // Predicated region
    $region46: #{gnn_node_forward.1} parent=1 // pred_check
      _
    $region47: #{gnn_node_forward.1} parent=1 // pred_check_branch
      %49 = sbr.rel (0) target = $region49
    $region48: #{gnn_node_forward.1} parent=1 // pred_region
      %50 = dma.done [#allocation4], 16
    $region49: #{gnn_node_forward.1} parent=1 // pred_fallthru
      _
    %51 = sfence
    %v53 = vld [vmem:[%s3] sm:$0xf]
    %v54 = vld [vmem:[%s3 + $0x4] sm:$0xf]
    %v55 = vld [vmem:[%s3 + $0x8] sm:$0xf]
    %v56 = vld [vmem:[%s3 + $0xc] sm:$0xf]
    %v57 = vld [vmem:[%s4] sm:$0xf]
    %v58 = vld [vmem:[%s4 + $0x4] sm:$0xf]
    %v59 = vld [vmem:[%s2] sm:$0xf]
    %v60 = vld [vmem:[%s2 + $0x4] sm:$0xf]
    %v61 = vld [vmem:[%s2 + $0x8] sm:$0xf]
    %v62 = vld [vmem:[%s2 + $0xc] sm:$0xf]
    %v63 = vld [vmem:[%s1] sm:$0xff]
    %v64 = vld [vmem:[%s1 + $0x8] sm:$0xff]
    %v65 = vld [vmem:[%s5] sm:$0xf]
    %v66 = vld [vmem:[%s5 + $0x4] sm:$0xf]
    %v67 = vld [vmem:[%s6] sm:$0x1]
    %v69 = vlaneseq
    %v70 = vshrl.u32 %v69, 7
    %v71 = vsub.s32 0, %v70
    %v72 = vrot.slane %v67, %v71
    %v78 = vunpack.c.l.b16 %v59
    %v79 = vunpack.c.l.b16 %v60
    %v80 = vunpack.c.l.b16 %v61
    %v81 = vunpack.c.l.b16 %v62
    %v82 = vpack.c.b16 %v79, %v78
    %v83 = vpack.c.b16 %v81, %v80
    %v86 = vunpack.c.l.b16 %v65
    %v87 = vunpack.c.l.b16 %v66
    %v88 = vpack.c.b16 %v87, %v86
    %vm90 = vcmask 130048
    %v92 = vsel %vm90, %v82, 0
    %v95 = vsel %vm90, %v83, 0
    %97 = vmatprep.subr.bf16.mxu0 0
    %98 = vmatpush1.bf16.msra.mxu0 %v88
    %99 = vmatprep.subr.bf16.mxu0 0
    %100 = vmatpush1.bf16.msra.mxu0 0
    %101 = vmatprep.subr.bf16.mxu0 0
    %102 = vmatpush1.bf16.msra.mxu0 0
    %103 = vmatprep.subr.bf16.mxu0 0
    %104 = vmatpush1.bf16.msra.mxu0 0
    %105 = vmatprep.subr.bf16.mxu0 0
    %106 = vmatpush1.bf16.msra.mxu0 0
    %107 = vmatprep.subr.bf16.mxu0 0
    %108 = vmatpush1.bf16.msra.mxu0 0
    %109 = vmatprep.subr.bf16.mxu0 0
    %110 = vmatpush1.bf16.msra.mxu0 0
    %111 = vmatprep.subr.bf16.mxu0 0
    %112 = vmatpush1.bf16.msra.mxu0 0
    %113 = vmatprep.subr.bf16.mxu0 0
    %114 = vmatpush1.bf16.msra.mxu0 0
    %115 = vmatprep.subr.bf16.mxu0 0
    %116 = vmatpush1.bf16.msra.mxu0 0
    %117 = vmatprep.subr.bf16.mxu0 0
    %118 = vmatpush1.bf16.msra.mxu0 0
    %119 = vmatprep.subr.bf16.mxu0 0
    %120 = vmatpush1.bf16.msra.mxu0 0
    %121 = vmatprep.subr.bf16.mxu0 0
    %122 = vmatpush1.bf16.msra.mxu0 0
    %123 = vmatprep.subr.bf16.mxu0 0
    %124 = vmatpush1.bf16.msra.mxu0 0
    %125 = vmatprep.subr.bf16.mxu0 0
    %126 = vmatpush1.bf16.msra.mxu0 0
    %127 = vmatprep.subr.bf16.mxu0 0
    %128 = vmatpush1.bf16.msra.mxu0 0
    %129 = vmatprep.mubr.bf16.mxu0 0
    %130 = vmatmul.mubr.bf16.gmra.mrb[0].mxu0 %v92
    %v131 = vpop.f32.mrb[0].mxu0
    %v132 = vadd.f32 %v72, %v131
    %v133 = vpop.f32.mrb[0].mxu0
    %v134 = vpop.f32.mrb[0].mxu0
    %v135 = vadd.f32 %v72, %v134
    %v136 = vpop.f32.mrb[0].mxu0
    %137 = vmatprep.mubr.bf16.mxu0 0
    %138 = vmatmul.mubr.bf16.gmra.mrb[0].mxu0 %v95
    %v139 = vpop.f32.mrb[0].mxu0
    %v140 = vadd.f32 %v72, %v139
    %v141 = vpop.f32.mrb[0].mxu0
    %v142 = vpop.f32.mrb[0].mxu0
    %v143 = vadd.f32 %v72, %v142
    %v144 = vpop.f32.mrb[0].mxu0
    %145 = vdwg.mxu0
    %v146 = vpack.c.bf16 %v64, %v63
    %v151 = vunpack.c.l.b16 %v53
    %v152 = vunpack.c.l.b16 %v54
    %v153 = vunpack.c.l.b16 %v55
    %v154 = vunpack.c.l.b16 %v56
    %v155 = vpack.c.b16 %v152, %v151
    %v156 = vpack.c.b16 %v154, %v153
    %v158 = vsel %vm90, %v155, 0
    %v161 = vsel %vm90, %v156, 0
    %163 = vmatprep.subr.bf16.mxu0 0
    %164 = vmatpush1.bf16.msra.mxu0 %v146
    %165 = vmatprep.subr.bf16.mxu0 0
    %166 = vmatpush1.bf16.msra.mxu0 0
    %167 = vmatprep.subr.bf16.mxu0 0
    %168 = vmatpush1.bf16.msra.mxu0 0
    %169 = vmatprep.subr.bf16.mxu0 0
    %170 = vmatpush1.bf16.msra.mxu0 0
    %171 = vmatprep.subr.bf16.mxu0 0
    %172 = vmatpush1.bf16.msra.mxu0 0
    %173 = vmatprep.subr.bf16.mxu0 0
    %174 = vmatpush1.bf16.msra.mxu0 0
    %175 = vmatprep.subr.bf16.mxu0 0
    %176 = vmatpush1.bf16.msra.mxu0 0
    %177 = vmatprep.subr.bf16.mxu0 0
    %178 = vmatpush1.bf16.msra.mxu0 0
    %179 = vmatprep.subr.bf16.mxu0 0
    %180 = vmatpush1.bf16.msra.mxu0 0
    %181 = vmatprep.subr.bf16.mxu0 0
    %182 = vmatpush1.bf16.msra.mxu0 0
    %183 = vmatprep.subr.bf16.mxu0 0
    %184 = vmatpush1.bf16.msra.mxu0 0
    %185 = vmatprep.subr.bf16.mxu0 0
    %186 = vmatpush1.bf16.msra.mxu0 0
    %187 = vmatprep.subr.bf16.mxu0 0
    %188 = vmatpush1.bf16.msra.mxu0 0
    %189 = vmatprep.subr.bf16.mxu0 0
    %190 = vmatpush1.bf16.msra.mxu0 0
    %191 = vmatprep.subr.bf16.mxu0 0
    %192 = vmatpush1.bf16.msra.mxu0 0
    %193 = vmatprep.subr.bf16.mxu0 0
    %194 = vmatpush1.bf16.msra.mxu0 0
    %195 = vmatprep.mubr.bf16.mxu0 0
    %196 = vmatmul.mubr.bf16.gmra.mrb[0].mxu0 %v158
    %v197 = vpop.f32.mrb[0].mxu0
    %v198 = vadd.f32 %v132, %v197
    %v199 = vpop.f32.mrb[0].mxu0
    %v200 = vpop.f32.mrb[0].mxu0
    %v201 = vadd.f32 %v135, %v200
    %v202 = vpop.f32.mrb[0].mxu0
    %203 = vmatprep.mubr.bf16.mxu0 0
    %204 = vmatmul.mubr.bf16.gmra.mrb[0].mxu0 %v161
    %v205 = vpop.f32.mrb[0].mxu0
    %v206 = vadd.f32 %v140, %v205
    %v207 = vpop.f32.mrb[0].mxu0
    %v208 = vpop.f32.mrb[0].mxu0
    %v209 = vadd.f32 %v143, %v208
    %v210 = vpop.f32.mrb[0].mxu0
    %211 = vdwg.mxu0
    %v212 = vmax.f32 %v198, 0.0
    %v213 = vmax.f32 %v201, 0.0
    %v214 = vmax.f32 %v206, 0.0
    %v215 = vmax.f32 %v209, 0.0
    %v216 = vpack.c.bf16 %v213, %v212
    %v217 = vpack.c.bf16 %v215, %v214
    %v220 = vunpack.c.l.b16 %v57
    %v221 = vunpack.c.l.b16 %v58
    %v222 = vpack.c.b16 %v221, %v220
    %vm223 = vcmask 261120
    %v225 = vsel %vm223, %v222, 0
    %227 = vmatprep.subr.bf16.mxu0 0
    %228 = vmatpush1.bf16.msra.mxu0 %v216
    %229 = vmatprep.subr.bf16.mxu0 0
    %230 = vmatpush1.bf16.msra.mxu0 %v217
    %231 = vmatprep.subr.bf16.mxu0 0
    %232 = vmatpush1.bf16.msra.mxu0 0
    %233 = vmatprep.subr.bf16.mxu0 0
    %234 = vmatpush1.bf16.msra.mxu0 0
    %235 = vmatprep.subr.bf16.mxu0 0
    %236 = vmatpush1.bf16.msra.mxu0 0
    %237 = vmatprep.subr.bf16.mxu0 0
    %238 = vmatpush1.bf16.msra.mxu0 0
    %239 = vmatprep.subr.bf16.mxu0 0
    %240 = vmatpush1.bf16.msra.mxu0 0
    %241 = vmatprep.subr.bf16.mxu0 0
    %242 = vmatpush1.bf16.msra.mxu0 0
    %243 = vmatprep.subr.bf16.mxu0 0
    %244 = vmatpush1.bf16.msra.mxu0 0
    %245 = vmatprep.subr.bf16.mxu0 0
    %246 = vmatpush1.bf16.msra.mxu0 0
    %247 = vmatprep.subr.bf16.mxu0 0
    %248 = vmatpush1.bf16.msra.mxu0 0
    %249 = vmatprep.subr.bf16.mxu0 0
    %250 = vmatpush1.bf16.msra.mxu0 0
    %251 = vmatprep.subr.bf16.mxu0 0
    %252 = vmatpush1.bf16.msra.mxu0 0
    %253 = vmatprep.subr.bf16.mxu0 0
    %254 = vmatpush1.bf16.msra.mxu0 0
    %255 = vmatprep.subr.bf16.mxu0 0
    %256 = vmatpush1.bf16.msra.mxu0 0
    %257 = vmatprep.subr.bf16.mxu0 0
    %258 = vmatpush1.bf16.msra.mxu0 0
    %259 = vmatprep.mubr.bf16.mxu0 0
    %260 = vmatmul.mubr.bf16.gmra.mrb[0].mxu0 %v225
    %v261 = vpop.f32.mrb[0].mxu0
    %v262 = vadd.f32 0.0, %v261
    %v263 = vpop.f32.mrb[0].mxu0
    %v264 = vpop.f32.mrb[0].mxu0
    %v265 = vadd.f32 0.0, %v264
    %v266 = vpop.f32.mrb[0].mxu0
    %267 = vdwg.mxu0
    %s268 = sld [smem:[#allocation2]]
    %v269 = vstv %s268
    %v270 = vmul.f32 %v269, %v63
    %v271 = vmul.f32 %v269, %v64
    %v272 = vadd.f32 %v270, %v262
    %v273 = vadd.f32 %v271, %v265
    %v274 = vpack.c.bf16 %v273, %v272
    %v275 = vld [vmem:[%s7] sm:$0xf]
    %v276 = vld [vmem:[%s7 + $0x4] sm:$0xf]
    %v277 = vld [vmem:[%s7 + $0x8] sm:$0xf]
    %v278 = vld [vmem:[%s7 + $0xc] sm:$0xf]
    %v279 = vld [vmem:[%s7 + $0x10] sm:$0xf]
    %v280 = vld [vmem:[%s7 + $0x14] sm:$0xf]
    %v281 = vld [vmem:[%s7 + $0x18] sm:$0xf]
    %v282 = vld [vmem:[%s7 + $0x1c] sm:$0xf]
    %v283 = vld [vmem:[%s7 + $0x20] sm:$0xf]
    %v284 = vld [vmem:[%s7 + $0x24] sm:$0xf]
    %v285 = vld [vmem:[%s7 + $0x28] sm:$0xf]
    %v286 = vld [vmem:[%s7 + $0x2c] sm:$0xf]
    %v287 = vld [vmem:[%s7 + $0x30] sm:$0xf]
    %v288 = vld [vmem:[%s7 + $0x34] sm:$0xf]
    %v289 = vld [vmem:[%s7 + $0x38] sm:$0xf]
    %v290 = vld [vmem:[%s7 + $0x3c] sm:$0xf]
    %v291 = vld [vmem:[%s8] sm:$0x1]
    %v293 = vlaneseq
    %v294 = vshrl.u32 %v293, 7
    %v295 = vsub.s32 0, %v294
    %v296 = vrot.slane %v291, %v295
    %v314 = vunpack.c.l.b16 %v275
    %v315 = vunpack.c.l.b16 %v276
    %v316 = vunpack.c.l.b16 %v277
    %v317 = vunpack.c.l.b16 %v278
    %v318 = vunpack.c.l.b16 %v279
    %v319 = vunpack.c.l.b16 %v280
    %v320 = vunpack.c.l.b16 %v281
    %v321 = vunpack.c.l.b16 %v282
    %v322 = vunpack.c.l.b16 %v283
    %v323 = vunpack.c.l.b16 %v284
    %v324 = vunpack.c.l.b16 %v285
    %v325 = vunpack.c.l.b16 %v286
    %v326 = vunpack.c.l.b16 %v287
    %v327 = vunpack.c.l.b16 %v288
    %v328 = vunpack.c.l.b16 %v289
    %v329 = vunpack.c.l.b16 %v290
    %v330 = vpack.c.b16 %v315, %v314
    %v331 = vpack.c.b16 %v317, %v316
    %v332 = vpack.c.b16 %v319, %v318
    %v333 = vpack.c.b16 %v321, %v320
    %v334 = vpack.c.b16 %v323, %v322
    %v335 = vpack.c.b16 %v325, %v324
    %v336 = vpack.c.b16 %v327, %v326
    %v337 = vpack.c.b16 %v329, %v328
    %346 = vmatprep.subr.bf16.mxu0 0
    %347 = vmatpush1.bf16.msra.mxu0 %v330
    %348 = vmatprep.subr.bf16.mxu0 0
    %349 = vmatpush1.bf16.msra.mxu0 %v331
    %350 = vmatprep.subr.bf16.mxu0 0
    %351 = vmatpush1.bf16.msra.mxu0 %v332
    %352 = vmatprep.subr.bf16.mxu0 0
    %353 = vmatpush1.bf16.msra.mxu0 %v333
    %354 = vmatprep.subr.bf16.mxu0 0
    %355 = vmatpush1.bf16.msra.mxu0 %v334
    %356 = vmatprep.subr.bf16.mxu0 0
    %357 = vmatpush1.bf16.msra.mxu0 %v335
    %358 = vmatprep.subr.bf16.mxu0 0
    %359 = vmatpush1.bf16.msra.mxu0 %v336
    %360 = vmatprep.subr.bf16.mxu0 0
    %361 = vmatpush1.bf16.msra.mxu0 %v337
    %362 = vmatprep.subr.bf16.mxu0 0
    %363 = vmatpush1.bf16.msra.mxu0 0
    %364 = vmatprep.subr.bf16.mxu0 0
    %365 = vmatpush1.bf16.msra.mxu0 0
    %366 = vmatprep.subr.bf16.mxu0 0
    %367 = vmatpush1.bf16.msra.mxu0 0
    %368 = vmatprep.subr.bf16.mxu0 0
    %369 = vmatpush1.bf16.msra.mxu0 0
    %370 = vmatprep.subr.bf16.mxu0 0
    %371 = vmatpush1.bf16.msra.mxu0 0
    %372 = vmatprep.subr.bf16.mxu0 0
    %373 = vmatpush1.bf16.msra.mxu0 0
    %374 = vmatprep.subr.bf16.mxu0 0
    %375 = vmatpush1.bf16.msra.mxu0 0
    %376 = vmatprep.subr.bf16.mxu0 0
    %377 = vmatpush1.bf16.msra.mxu0 0
    %378 = vmatprep.mubr.bf16.mxu0 0
    %379 = vmatmul.mubr.bf16.gmra.mrb[0].mxu0 %v274
    %v380 = vpop.f32.mrb[0].mxu0
    %v381 = vadd.f32 %v296, %v380
    %v382 = vpop.f32.mrb[0].mxu0
    %v383 = vpop.f32.mrb[0].mxu0
    %v384 = vadd.f32 %v296, %v383
    %v385 = vpop.f32.mrb[0].mxu0
    %386 = vdwg.mxu0
    %v387 = vmax.f32 %v381, 0.0
    %v388 = vmax.f32 %v384, 0.0
    %v389 = vpack.c.bf16 %v388, %v387
    %v390 = vld [vmem:[%s9] sm:$0xf]
    %v391 = vld [vmem:[%s9 + $0x4] sm:$0xf]
    %v392 = vld [vmem:[%s9 + $0x8] sm:$0xf]
    %v393 = vld [vmem:[%s9 + $0xc] sm:$0xf]
    %v394 = vld [vmem:[%s9 + $0x10] sm:$0xf]
    %v395 = vld [vmem:[%s9 + $0x14] sm:$0xf]
    %v396 = vld [vmem:[%s9 + $0x18] sm:$0xf]
    %v397 = vld [vmem:[%s9 + $0x1c] sm:$0xf]
    %v398 = vld [vmem:[%s9 + $0x20] sm:$0xf]
    %v399 = vld [vmem:[%s9 + $0x24] sm:$0xf]
    %v400 = vld [vmem:[%s9 + $0x28] sm:$0xf]
    %v401 = vld [vmem:[%s9 + $0x2c] sm:$0xf]
    %v402 = vld [vmem:[%s9 + $0x30] sm:$0xf]
    %v403 = vld [vmem:[%s9 + $0x34] sm:$0xf]
    %v404 = vld [vmem:[%s9 + $0x38] sm:$0xf]
    %v405 = vld [vmem:[%s9 + $0x3c] sm:$0xf]
    %v406 = vld [vmem:[%s10] sm:$0x1]
    %v408 = vlaneseq
    %v409 = vshrl.u32 %v408, 7
    %v410 = vsub.s32 0, %v409
    %v411 = vrot.slane %v406, %v410
    %v429 = vunpack.c.l.b16 %v390
    %v430 = vunpack.c.l.b16 %v391
    %v431 = vunpack.c.l.b16 %v392
    %v432 = vunpack.c.l.b16 %v393
    %v433 = vunpack.c.l.b16 %v394
    %v434 = vunpack.c.l.b16 %v395
    %v435 = vunpack.c.l.b16 %v396
    %v436 = vunpack.c.l.b16 %v397
    %v437 = vunpack.c.l.b16 %v398
    %v438 = vunpack.c.l.b16 %v399
    %v439 = vunpack.c.l.b16 %v400
    %v440 = vunpack.c.l.b16 %v401
    %v441 = vunpack.c.l.b16 %v402
    %v442 = vunpack.c.l.b16 %v403
    %v443 = vunpack.c.l.b16 %v404
    %v444 = vunpack.c.l.b16 %v405
    %v445 = vpack.c.b16 %v430, %v429
    %v446 = vpack.c.b16 %v432, %v431
    %v447 = vpack.c.b16 %v434, %v433
    %v448 = vpack.c.b16 %v436, %v435
    %v449 = vpack.c.b16 %v438, %v437
    %v450 = vpack.c.b16 %v440, %v439
    %v451 = vpack.c.b16 %v442, %v441
    %v452 = vpack.c.b16 %v444, %v443
    %461 = vmatprep.subr.bf16.mxu0 0
    %462 = vmatpush1.bf16.msra.mxu0 %v445
    %463 = vmatprep.subr.bf16.mxu0 0
    %464 = vmatpush1.bf16.msra.mxu0 %v446
    %465 = vmatprep.subr.bf16.mxu0 0
    %466 = vmatpush1.bf16.msra.mxu0 %v447
    %467 = vmatprep.subr.bf16.mxu0 0
    %468 = vmatpush1.bf16.msra.mxu0 %v448
    %469 = vmatprep.subr.bf16.mxu0 0
    %470 = vmatpush1.bf16.msra.mxu0 %v449
    %471 = vmatprep.subr.bf16.mxu0 0
    %472 = vmatpush1.bf16.msra.mxu0 %v450
    %473 = vmatprep.subr.bf16.mxu0 0
    %474 = vmatpush1.bf16.msra.mxu0 %v451
    %475 = vmatprep.subr.bf16.mxu0 0
    %476 = vmatpush1.bf16.msra.mxu0 %v452
    %477 = vmatprep.subr.bf16.mxu0 0
    %478 = vmatpush1.bf16.msra.mxu0 0
    %479 = vmatprep.subr.bf16.mxu0 0
    %480 = vmatpush1.bf16.msra.mxu0 0
    %481 = vmatprep.subr.bf16.mxu0 0
    %482 = vmatpush1.bf16.msra.mxu0 0
    %483 = vmatprep.subr.bf16.mxu0 0
    %484 = vmatpush1.bf16.msra.mxu0 0
    %485 = vmatprep.subr.bf16.mxu0 0
    %486 = vmatpush1.bf16.msra.mxu0 0
    %487 = vmatprep.subr.bf16.mxu0 0
    %488 = vmatpush1.bf16.msra.mxu0 0
    %489 = vmatprep.subr.bf16.mxu0 0
    %490 = vmatpush1.bf16.msra.mxu0 0
    %491 = vmatprep.subr.bf16.mxu0 0
    %492 = vmatpush1.bf16.msra.mxu0 0
    %493 = vmatprep.mubr.bf16.mxu0 0
    %494 = vmatmul.mubr.bf16.gmra.mrb[0].mxu0 %v389
    %v495 = vpop.f32.mrb[0].mxu0
    %v496 = vadd.f32 %v411, %v495
    %v497 = vpop.f32.mrb[0].mxu0
    %v498 = vpop.f32.mrb[0].mxu0
    %v499 = vadd.f32 %v411, %v498
    %v500 = vpop.f32.mrb[0].mxu0
    %501 = vdwg.mxu0
    %v502 = vmax.f32 %v496, 0.0
    %v503 = vmax.f32 %v499, 0.0
    %s504 = scalar_lea.vmem %s5, 8
    %v505 = vld [vmem:[%s504] sm:$0xf]
    %v506 = vld [vmem:[%s504 + $0x4] sm:$0xf]
    %s507 = scalar_lea.vmem %s6, 1
    %v508 = vld [vmem:[%s507] sm:$0x1]
    %v510 = vlaneseq
    %v511 = vshrl.u32 %v510, 7
    %v512 = vsub.s32 0, %v511
    %v513 = vrot.slane %v508, %v512
    %v517 = vunpack.c.l.b16 %v505
    %v518 = vunpack.c.l.b16 %v506
    %v519 = vpack.c.b16 %v518, %v517
    %521 = vmatprep.subr.bf16.mxu0 0
    %522 = vmatpush1.bf16.msra.mxu0 %v519
    %523 = vmatprep.subr.bf16.mxu0 0
    %524 = vmatpush1.bf16.msra.mxu0 0
    %525 = vmatprep.subr.bf16.mxu0 0
    %526 = vmatpush1.bf16.msra.mxu0 0
    %527 = vmatprep.subr.bf16.mxu0 0
    %528 = vmatpush1.bf16.msra.mxu0 0
    %529 = vmatprep.subr.bf16.mxu0 0
    %530 = vmatpush1.bf16.msra.mxu0 0
    %531 = vmatprep.subr.bf16.mxu0 0
    %532 = vmatpush1.bf16.msra.mxu0 0
    %533 = vmatprep.subr.bf16.mxu0 0
    %534 = vmatpush1.bf16.msra.mxu0 0
    %535 = vmatprep.subr.bf16.mxu0 0
    %536 = vmatpush1.bf16.msra.mxu0 0
    %537 = vmatprep.subr.bf16.mxu0 0
    %538 = vmatpush1.bf16.msra.mxu0 0
    %539 = vmatprep.subr.bf16.mxu0 0
    %540 = vmatpush1.bf16.msra.mxu0 0
    %541 = vmatprep.subr.bf16.mxu0 0
    %542 = vmatpush1.bf16.msra.mxu0 0
    %543 = vmatprep.subr.bf16.mxu0 0
    %544 = vmatpush1.bf16.msra.mxu0 0
    %545 = vmatprep.subr.bf16.mxu0 0
    %546 = vmatpush1.bf16.msra.mxu0 0
    %547 = vmatprep.subr.bf16.mxu0 0
    %548 = vmatpush1.bf16.msra.mxu0 0
    %549 = vmatprep.subr.bf16.mxu0 0
    %550 = vmatpush1.bf16.msra.mxu0 0
    %551 = vmatprep.subr.bf16.mxu0 0
    %552 = vmatpush1.bf16.msra.mxu0 0
    %553 = vmatprep.mubr.bf16.mxu0 0
    %554 = vmatmul.mubr.bf16.gmra.mrb[0].mxu0 %v92
    %v555 = vpop.f32.mrb[0].mxu0
    %v556 = vadd.f32 %v513, %v555
    %v557 = vpop.f32.mrb[0].mxu0
    %v558 = vpop.f32.mrb[0].mxu0
    %v559 = vadd.f32 %v513, %v558
    %v560 = vpop.f32.mrb[0].mxu0
    %561 = vmatprep.mubr.bf16.mxu0 0
    %562 = vmatmul.mubr.bf16.gmra.mrb[0].mxu0 %v95
    %v563 = vpop.f32.mrb[0].mxu0
    %v564 = vadd.f32 %v513, %v563
    %v565 = vpop.f32.mrb[0].mxu0
    %v566 = vpop.f32.mrb[0].mxu0
    %v567 = vadd.f32 %v513, %v566
    %v568 = vpop.f32.mrb[0].mxu0
    %569 = vdwg.mxu0
    %v570 = vpack.c.bf16 %v503, %v502
    %571 = vmatprep.subr.bf16.mxu0 0
    %572 = vmatpush1.bf16.msra.mxu0 %v570
    %573 = vmatprep.subr.bf16.mxu0 0
    %574 = vmatpush1.bf16.msra.mxu0 0
    %575 = vmatprep.subr.bf16.mxu0 0
    %576 = vmatpush1.bf16.msra.mxu0 0
    %577 = vmatprep.subr.bf16.mxu0 0
    %578 = vmatpush1.bf16.msra.mxu0 0
    %579 = vmatprep.subr.bf16.mxu0 0
    %580 = vmatpush1.bf16.msra.mxu0 0
    %581 = vmatprep.subr.bf16.mxu0 0
    %582 = vmatpush1.bf16.msra.mxu0 0
    %583 = vmatprep.subr.bf16.mxu0 0
    %584 = vmatpush1.bf16.msra.mxu0 0
    %585 = vmatprep.subr.bf16.mxu0 0
    %586 = vmatpush1.bf16.msra.mxu0 0
    %587 = vmatprep.subr.bf16.mxu0 0
    %588 = vmatpush1.bf16.msra.mxu0 0
    %589 = vmatprep.subr.bf16.mxu0 0
    %590 = vmatpush1.bf16.msra.mxu0 0
    %591 = vmatprep.subr.bf16.mxu0 0
    %592 = vmatpush1.bf16.msra.mxu0 0
    %593 = vmatprep.subr.bf16.mxu0 0
    %594 = vmatpush1.bf16.msra.mxu0 0
    %595 = vmatprep.subr.bf16.mxu0 0
    %596 = vmatpush1.bf16.msra.mxu0 0
    %597 = vmatprep.subr.bf16.mxu0 0
    %598 = vmatpush1.bf16.msra.mxu0 0
    %599 = vmatprep.subr.bf16.mxu0 0
    %600 = vmatpush1.bf16.msra.mxu0 0
    %601 = vmatprep.subr.bf16.mxu0 0
    %602 = vmatpush1.bf16.msra.mxu0 0
    %603 = vmatprep.mubr.bf16.mxu0 0
    %604 = vmatmul.mubr.bf16.gmra.mrb[0].mxu0 %v158
    %v605 = vpop.f32.mrb[0].mxu0
    %v606 = vadd.f32 %v556, %v605
    %v607 = vpop.f32.mrb[0].mxu0
    %v608 = vpop.f32.mrb[0].mxu0
    %v609 = vadd.f32 %v559, %v608
    %v610 = vpop.f32.mrb[0].mxu0
    %611 = vmatprep.mubr.bf16.mxu0 0
    %612 = vmatmul.mubr.bf16.gmra.mrb[0].mxu0 %v161
    %v613 = vpop.f32.mrb[0].mxu0
    %v614 = vadd.f32 %v564, %v613
    %v615 = vpop.f32.mrb[0].mxu0
    %v616 = vpop.f32.mrb[0].mxu0
    %v617 = vadd.f32 %v567, %v616
    %v618 = vpop.f32.mrb[0].mxu0
    %619 = vdwg.mxu0
    %v620 = vmax.f32 %v606, 0.0
    %v621 = vmax.f32 %v609, 0.0
    %v622 = vmax.f32 %v614, 0.0
    %v623 = vmax.f32 %v617, 0.0
    %v624 = vpack.c.bf16 %v621, %v620
    %v625 = vpack.c.bf16 %v623, %v622
    %626 = vmatprep.subr.bf16.mxu0 0
    %627 = vmatpush1.bf16.msra.mxu0 %v624
    %628 = vmatprep.subr.bf16.mxu0 0
    %629 = vmatpush1.bf16.msra.mxu0 %v625
    %630 = vmatprep.subr.bf16.mxu0 0
    %631 = vmatpush1.bf16.msra.mxu0 0
    %632 = vmatprep.subr.bf16.mxu0 0
    %633 = vmatpush1.bf16.msra.mxu0 0
    %634 = vmatprep.subr.bf16.mxu0 0
    %635 = vmatpush1.bf16.msra.mxu0 0
    %636 = vmatprep.subr.bf16.mxu0 0
    %637 = vmatpush1.bf16.msra.mxu0 0
    %638 = vmatprep.subr.bf16.mxu0 0
    %639 = vmatpush1.bf16.msra.mxu0 0
    %640 = vmatprep.subr.bf16.mxu0 0
    %641 = vmatpush1.bf16.msra.mxu0 0
    %642 = vmatprep.subr.bf16.mxu0 0
    %643 = vmatpush1.bf16.msra.mxu0 0
    %644 = vmatprep.subr.bf16.mxu0 0
    %645 = vmatpush1.bf16.msra.mxu0 0
    %646 = vmatprep.subr.bf16.mxu0 0
    %647 = vmatpush1.bf16.msra.mxu0 0
    %648 = vmatprep.subr.bf16.mxu0 0
    %649 = vmatpush1.bf16.msra.mxu0 0
    %650 = vmatprep.subr.bf16.mxu0 0
    %651 = vmatpush1.bf16.msra.mxu0 0
    %652 = vmatprep.subr.bf16.mxu0 0
    %653 = vmatpush1.bf16.msra.mxu0 0
    %654 = vmatprep.subr.bf16.mxu0 0
    %655 = vmatpush1.bf16.msra.mxu0 0
    %656 = vmatprep.subr.bf16.mxu0 0
    %657 = vmatpush1.bf16.msra.mxu0 0
    %658 = vmatprep.mubr.bf16.mxu0 0
    %659 = vmatmul.mubr.bf16.gmra.mrb[0].mxu0 %v225
    %v660 = vpop.f32.mrb[0].mxu0
    %v661 = vadd.f32 0.0, %v660
    %v662 = vpop.f32.mrb[0].mxu0
    %v663 = vpop.f32.mrb[0].mxu0
    %v664 = vadd.f32 0.0, %v663
    %v665 = vpop.f32.mrb[0].mxu0
    %666 = vdwg.mxu0
    %s667 = sld [smem:[#allocation2 + $0x1]]
    %v668 = vstv %s667
    %v669 = vmul.f32 %v668, %v502
    %v670 = vmul.f32 %v668, %v503
    %v671 = vadd.f32 %v669, %v661
    %v672 = vadd.f32 %v670, %v664
    %v673 = vpack.c.bf16 %v672, %v671
    %s674 = scalar_lea.vmem %s7, 64
    %v675 = vld [vmem:[%s674] sm:$0xf]
    %v676 = vld [vmem:[%s674 + $0x4] sm:$0xf]
    %v677 = vld [vmem:[%s674 + $0x8] sm:$0xf]
    %v678 = vld [vmem:[%s674 + $0xc] sm:$0xf]
    %v679 = vld [vmem:[%s674 + $0x10] sm:$0xf]
    %v680 = vld [vmem:[%s674 + $0x14] sm:$0xf]
    %v681 = vld [vmem:[%s674 + $0x18] sm:$0xf]
    %v682 = vld [vmem:[%s674 + $0x1c] sm:$0xf]
    %v683 = vld [vmem:[%s674 + $0x20] sm:$0xf]
    %v684 = vld [vmem:[%s674 + $0x24] sm:$0xf]
    %v685 = vld [vmem:[%s674 + $0x28] sm:$0xf]
    %v686 = vld [vmem:[%s674 + $0x2c] sm:$0xf]
    %v687 = vld [vmem:[%s674 + $0x30] sm:$0xf]
    %v688 = vld [vmem:[%s674 + $0x34] sm:$0xf]
    %v689 = vld [vmem:[%s674 + $0x38] sm:$0xf]
    %v690 = vld [vmem:[%s674 + $0x3c] sm:$0xf]
    %s691 = scalar_lea.vmem %s8, 1
    %v692 = vld [vmem:[%s691] sm:$0x1]
    %v694 = vlaneseq
    %v695 = vshrl.u32 %v694, 7
    %v696 = vsub.s32 0, %v695
    %v697 = vrot.slane %v692, %v696
    %v715 = vunpack.c.l.b16 %v675
    %v716 = vunpack.c.l.b16 %v676
    %v717 = vunpack.c.l.b16 %v677
    %v718 = vunpack.c.l.b16 %v678
    %v719 = vunpack.c.l.b16 %v679
    %v720 = vunpack.c.l.b16 %v680
    %v721 = vunpack.c.l.b16 %v681
    %v722 = vunpack.c.l.b16 %v682
    %v723 = vunpack.c.l.b16 %v683
    %v724 = vunpack.c.l.b16 %v684
    %v725 = vunpack.c.l.b16 %v685
    %v726 = vunpack.c.l.b16 %v686
    %v727 = vunpack.c.l.b16 %v687
    %v728 = vunpack.c.l.b16 %v688
    %v729 = vunpack.c.l.b16 %v689
    %v730 = vunpack.c.l.b16 %v690
    %v731 = vpack.c.b16 %v716, %v715
    %v732 = vpack.c.b16 %v718, %v717
    %v733 = vpack.c.b16 %v720, %v719
    %v734 = vpack.c.b16 %v722, %v721
    %v735 = vpack.c.b16 %v724, %v723
    %v736 = vpack.c.b16 %v726, %v725
    %v737 = vpack.c.b16 %v728, %v727
    %v738 = vpack.c.b16 %v730, %v729
    %747 = vmatprep.subr.bf16.mxu0 0
    %748 = vmatpush1.bf16.msra.mxu0 %v731
    %749 = vmatprep.subr.bf16.mxu0 0
    %750 = vmatpush1.bf16.msra.mxu0 %v732
    %751 = vmatprep.subr.bf16.mxu0 0
    %752 = vmatpush1.bf16.msra.mxu0 %v733
    %753 = vmatprep.subr.bf16.mxu0 0
    %754 = vmatpush1.bf16.msra.mxu0 %v734
    %755 = vmatprep.subr.bf16.mxu0 0
    %756 = vmatpush1.bf16.msra.mxu0 %v735
    %757 = vmatprep.subr.bf16.mxu0 0
    %758 = vmatpush1.bf16.msra.mxu0 %v736
    %759 = vmatprep.subr.bf16.mxu0 0
    %760 = vmatpush1.bf16.msra.mxu0 %v737
    %761 = vmatprep.subr.bf16.mxu0 0
    %762 = vmatpush1.bf16.msra.mxu0 %v738
    %763 = vmatprep.subr.bf16.mxu0 0
    %764 = vmatpush1.bf16.msra.mxu0 0
    %765 = vmatprep.subr.bf16.mxu0 0
    %766 = vmatpush1.bf16.msra.mxu0 0
    %767 = vmatprep.subr.bf16.mxu0 0
    %768 = vmatpush1.bf16.msra.mxu0 0
    %769 = vmatprep.subr.bf16.mxu0 0
    %770 = vmatpush1.bf16.msra.mxu0 0
    %771 = vmatprep.subr.bf16.mxu0 0
    %772 = vmatpush1.bf16.msra.mxu0 0
    %773 = vmatprep.subr.bf16.mxu0 0
    %774 = vmatpush1.bf16.msra.mxu0 0
    %775 = vmatprep.subr.bf16.mxu0 0
    %776 = vmatpush1.bf16.msra.mxu0 0
    %777 = vmatprep.subr.bf16.mxu0 0
    %778 = vmatpush1.bf16.msra.mxu0 0
    %779 = vmatprep.mubr.bf16.mxu0 0
    %780 = vmatmul.mubr.bf16.gmra.mrb[0].mxu0 %v673
    %v781 = vpop.f32.mrb[0].mxu0
    %v782 = vadd.f32 %v697, %v781
    %v783 = vpop.f32.mrb[0].mxu0
    %v784 = vpop.f32.mrb[0].mxu0
    %v785 = vadd.f32 %v697, %v784
    %v786 = vpop.f32.mrb[0].mxu0
    %787 = vdwg.mxu0
    %v788 = vmax.f32 %v782, 0.0
    %v789 = vmax.f32 %v785, 0.0
    %v790 = vpack.c.bf16 %v789, %v788
    %s791 = scalar_lea.vmem %s9, 64
    %v792 = vld [vmem:[%s791] sm:$0xf]
    %v793 = vld [vmem:[%s791 + $0x4] sm:$0xf]
    %v794 = vld [vmem:[%s791 + $0x8] sm:$0xf]
    %v795 = vld [vmem:[%s791 + $0xc] sm:$0xf]
    %v796 = vld [vmem:[%s791 + $0x10] sm:$0xf]
    %v797 = vld [vmem:[%s791 + $0x14] sm:$0xf]
    %v798 = vld [vmem:[%s791 + $0x18] sm:$0xf]
    %v799 = vld [vmem:[%s791 + $0x1c] sm:$0xf]
    %v800 = vld [vmem:[%s791 + $0x20] sm:$0xf]
    %v801 = vld [vmem:[%s791 + $0x24] sm:$0xf]
    %v802 = vld [vmem:[%s791 + $0x28] sm:$0xf]
    %v803 = vld [vmem:[%s791 + $0x2c] sm:$0xf]
    %v804 = vld [vmem:[%s791 + $0x30] sm:$0xf]
    %v805 = vld [vmem:[%s791 + $0x34] sm:$0xf]
    %v806 = vld [vmem:[%s791 + $0x38] sm:$0xf]
    %v807 = vld [vmem:[%s791 + $0x3c] sm:$0xf]
    %s808 = scalar_lea.vmem %s10, 1
    %v809 = vld [vmem:[%s808] sm:$0x1]
    %v811 = vlaneseq
    %v812 = vshrl.u32 %v811, 7
    %v813 = vsub.s32 0, %v812
    %v814 = vrot.slane %v809, %v813
    %v832 = vunpack.c.l.b16 %v792
    %v833 = vunpack.c.l.b16 %v793
    %v834 = vunpack.c.l.b16 %v794
    %v835 = vunpack.c.l.b16 %v795
    %v836 = vunpack.c.l.b16 %v796
    %v837 = vunpack.c.l.b16 %v797
    %v838 = vunpack.c.l.b16 %v798
    %v839 = vunpack.c.l.b16 %v799
    %v840 = vunpack.c.l.b16 %v800
    %v841 = vunpack.c.l.b16 %v801
    %v842 = vunpack.c.l.b16 %v802
    %v843 = vunpack.c.l.b16 %v803
    %v844 = vunpack.c.l.b16 %v804
    %v845 = vunpack.c.l.b16 %v805
    %v846 = vunpack.c.l.b16 %v806
    %v847 = vunpack.c.l.b16 %v807
    %v848 = vpack.c.b16 %v833, %v832
    %v849 = vpack.c.b16 %v835, %v834
    %v850 = vpack.c.b16 %v837, %v836
    %v851 = vpack.c.b16 %v839, %v838
    %v852 = vpack.c.b16 %v841, %v840
    %v853 = vpack.c.b16 %v843, %v842
    %v854 = vpack.c.b16 %v845, %v844
    %v855 = vpack.c.b16 %v847, %v846
    %864 = vmatprep.subr.bf16.mxu0 0
    %865 = vmatpush1.bf16.msra.mxu0 %v848
    %866 = vmatprep.subr.bf16.mxu0 0
    %867 = vmatpush1.bf16.msra.mxu0 %v849
    %868 = vmatprep.subr.bf16.mxu0 0
    %869 = vmatpush1.bf16.msra.mxu0 %v850
    %870 = vmatprep.subr.bf16.mxu0 0
    %871 = vmatpush1.bf16.msra.mxu0 %v851
    %872 = vmatprep.subr.bf16.mxu0 0
    %873 = vmatpush1.bf16.msra.mxu0 %v852
    %874 = vmatprep.subr.bf16.mxu0 0
    %875 = vmatpush1.bf16.msra.mxu0 %v853
    %876 = vmatprep.subr.bf16.mxu0 0
    %877 = vmatpush1.bf16.msra.mxu0 %v854
    %878 = vmatprep.subr.bf16.mxu0 0
    %879 = vmatpush1.bf16.msra.mxu0 %v855
    %880 = vmatprep.subr.bf16.mxu0 0
    %881 = vmatpush1.bf16.msra.mxu0 0
    %882 = vmatprep.subr.bf16.mxu0 0
    %883 = vmatpush1.bf16.msra.mxu0 0
    %884 = vmatprep.subr.bf16.mxu0 0
    %885 = vmatpush1.bf16.msra.mxu0 0
    %886 = vmatprep.subr.bf16.mxu0 0
    %887 = vmatpush1.bf16.msra.mxu0 0
    %888 = vmatprep.subr.bf16.mxu0 0
    %889 = vmatpush1.bf16.msra.mxu0 0
    %890 = vmatprep.subr.bf16.mxu0 0
    %891 = vmatpush1.bf16.msra.mxu0 0
    %892 = vmatprep.subr.bf16.mxu0 0
    %893 = vmatpush1.bf16.msra.mxu0 0
    %894 = vmatprep.subr.bf16.mxu0 0
    %895 = vmatpush1.bf16.msra.mxu0 0
    %896 = vmatprep.mubr.bf16.mxu0 0
    %897 = vmatmul.mubr.bf16.gmra.mrb[0].mxu0 %v790
    %v898 = vpop.f32.mrb[0].mxu0
    %v899 = vadd.f32 %v814, %v898
    %v900 = vpop.f32.mrb[0].mxu0
    %v901 = vpop.f32.mrb[0].mxu0
    %v902 = vadd.f32 %v814, %v901
    %v903 = vpop.f32.mrb[0].mxu0
    %904 = vdwg.mxu0
    %905 = vst [vmem:[#allocation5] sm:$0xff] %v899
    %906 = vst [vmem:[#allocation5 + $0x8] sm:$0xff] %v902
    // Predicated region
    $region50: #{gnn_node_forward.1} parent=1 // pred_check
      _
    $region51: #{gnn_node_forward.1} parent=1 // pred_check_branch
      %908 = sbr.rel (0) target = $region53
    $region52: #{gnn_node_forward.1} parent=1 // pred_region
      %s910 = ssub.s32 256, 256
      %911 = vsyncadd [#allocation3], %s910
      %s912 = sshll.u32 [#allocation5], 4
      %s913 = int_to_ptr.vmem [resolvable:$true] %s912
      %918 = dma.vmem_to_hbm [thread:$0]  %s913, 256, %s11, [#allocation3], 128, 128, 8
    $region53: #{gnn_node_forward.1} parent=1 // pred_fallthru
      _
    // Predicated region
    $region54: #{gnn_node_forward.1} parent=1 // pred_check
      _
    $region55: #{gnn_node_forward.1} parent=1 // pred_check_branch
      %920 = sbr.rel (0) target = $region57
    $region56: #{gnn_node_forward.1} parent=1 // pred_region
      %921 = dma.done [#allocation3], 256
    $region57: #{gnn_node_forward.1} parent=1 // pred_fallthru
      _
    %922 = vsyncpa [#allocation3], 1
    %923 = vsyncpa [#allocation4], 1

</llo_original>
